<compile_context>
chip_gen: v7x
topology: tpu7x:2x2x1
jax: 0.10.0
libtpu: 0.0.40
codegen_flags: <defaults>
</compile_context>

<pallas_src>
import jax
import jax.numpy as jnp
from jax.experimental import pallas as pl
from jax.experimental.pallas import tpu as pltpu


def _logistic_kernel(x_ref, wt_ref, b_ref, o_ref):
    # x_ref: (TB, 784) bf16 streamed, wt_ref: (784, 10) bf16 resident,
    # b_ref: (1, 10) f32 resident, o_ref: (TB, 10) f32.
    acc = jnp.dot(
        x_ref[...], wt_ref[...],
        preferred_element_type=jnp.float32,   # f32 accumulation on the MXU
    )
    o_ref[...] = (acc + b_ref[...]).astype(o_ref.dtype)


def mnist_logistic(x, weight, bias, *, tb=2048, compute_dtype=jnp.bfloat16):
    """x: (B, 784) f32, weight: (10, 784) f32 (PyTorch layout), bias: (10,) f32.

    Returns (B, 10) f32 logits == x @ weight.T + bias (bf16 inputs,
    f32 accumulation).
    """
    B, K = x.shape
    N, K2 = weight.shape
    assert K == K2 == 784 and N == 10

    # Narrow the streamed / resident matmul operands; keep bias + output f32.
    x_c = x.astype(compute_dtype)
    wt_c = weight.T.astype(compute_dtype)        # (784, 10): natural MXU RHS layout
    b2 = bias.astype(jnp.float32).reshape(1, N)  # 2-D (sublane, lane) layout

    # Batch tile: multiple of 8 when tiling; if the whole batch fits in one
    # tile, use the full batch as a single block (full-extent block is legal).
    TB = tb if B > tb else B
    num_blocks = pl.cdiv(B, TB)

    return pl.pallas_call(
        _logistic_kernel,
        out_shape=jax.ShapeDtypeStruct((B, N), x.dtype),
        grid=(num_blocks,),
        in_specs=[
            pl.BlockSpec((TB, K), lambda i: (i, 0)),   # stream x per batch tile
            pl.BlockSpec((K, N), lambda i: (0, 0)),    # weight resident in VMEM
            pl.BlockSpec((1, N), lambda i: (0, 0)),    # bias resident in VMEM
        ],
        out_specs=pl.BlockSpec((TB, N), lambda i: (i, 0)),
        compiler_params=pltpu.CompilerParams(
            dimension_semantics=("parallel",),         # independent batch tiles
        ),
    )(x_c, wt_c, b2)


if __name__ == "__main__":
    key = jax.random.PRNGKey(0)
    kx, kw, kb, kx2 = jax.random.split(key, 4)

    in_features, out_features = 784, 10

    # Deterministic synthetic parameters (mimic nn.Linear init scale).
    bound = 1.0 / (in_features ** 0.5)
    weight = jax.random.uniform(
        kw, (out_features, in_features), jnp.float32, -bound, bound)
    bias = jax.random.uniform(kb, (out_features,), jnp.float32, -bound, bound)

    # --- small check (batch=2, single block) ---
    batch = 2
    x = jax.random.normal(kx, (batch, in_features), jnp.float32)
    out = jax.block_until_ready(mnist_logistic(x, weight, bias))
    ref = x @ weight.T + bias
    assert out.shape == (batch, out_features)
    # bf16 inputs / f32 accumulation: loose tolerance vs. the f32 reference.
    assert jnp.allclose(out, ref, atol=5e-2, rtol=5e-2), "mismatch vs reference (B=2)"

    # --- tiled check (batch not a multiple of the tile; exercises the
    #     pipelined multi-block path and the masked partial final block) ---
    batch2 = 1000
    x2 = jax.random.normal(kx2, (batch2, in_features), jnp.float32)
    out2 = jax.block_until_ready(mnist_logistic(x2, weight, bias, tb=256))
    ref2 = x2 @ weight.T + bias
    assert out2.shape == (batch2, out_features)
    assert jnp.allclose(out2, ref2, atol=5e-2, rtol=5e-2), "mismatch vs reference (B=1000)"

    print("KERNEL_OK")
</pallas_src>

<mosaic_0001>
module attributes {stable_mosaic.version = 11 : i64} {
  func.func @_logistic_kernel(%arg0: i32, %arg1: memref<2x784xbf16, #tpu.memory_space<vmem>>, %arg2: memref<784x10xbf16, #tpu.memory_space<vmem>>, %arg3: memref<1x10xf32, #tpu.memory_space<vmem>>, %arg4: memref<2x10xf32, #tpu.memory_space<vmem>>) attributes {dimension_semantics = [#tpu.dimension_semantics<parallel>], iteration_bounds = array<i64: 1>, scalar_prefetch = 0 : i64, scratch_operands = 0 : i64, tpu.core_type = #tpu.core_type<tc>, window_params = [{transform_indices = @transform_0, window_bounds = array<i64: 2, 784>}, {pipeline_mode = #tpu.pipeline_mode<synchronous>, transform_indices = @transform_1, window_bounds = array<i64: 784, 10>}, {pipeline_mode = #tpu.pipeline_mode<synchronous>, transform_indices = @transform_2, window_bounds = array<i64: 1, 10>}, {transform_indices = @transform_3, window_bounds = array<i64: 2, 10>}]} {
    %c0 = arith.constant 0 : index
    %c0_0 = arith.constant 0 : index
    %0 = vector.load %arg1[%c0, %c0_0] : memref<2x784xbf16, #tpu.memory_space<vmem>>, vector<2x784xbf16>
    %c0_1 = arith.constant 0 : index
    %c0_2 = arith.constant 0 : index
    %1 = vector.load %arg2[%c0_1, %c0_2] : memref<784x10xbf16, #tpu.memory_space<vmem>>, vector<784x10xbf16>
    %cst = arith.constant dense<0.000000e+00> : vector<2x10xf32>
    %2 = tpu.matmul %0, %1, %cst {dimension_numbers = #tpu.dot_dimension_numbers<[1], [0], [0], [1], [0, 0, 1, 1], [], []>} : vector<2x784xbf16>, vector<784x10xbf16>, vector<2x10xf32> -> vector<2x10xf32>
    %c0_3 = arith.constant 0 : index
    %c0_4 = arith.constant 0 : index
    %3 = vector.load %arg3[%c0_3, %c0_4] : memref<1x10xf32, #tpu.memory_space<vmem>>, vector<1x10xf32>
    %4 = vector.broadcast %3 : vector<1x10xf32> to vector<2x10xf32>
    %5 = arith.addf %2, %4 : vector<2x10xf32>
    %c0_5 = arith.constant 0 : index
    %c0_6 = arith.constant 0 : index
    %6 = vector.load %arg4[%c0_5, %c0_6] : memref<2x10xf32, #tpu.memory_space<vmem>>, vector<2x10xf32>
    tpu.vector_store %arg4[%c0_5, %c0_6], %5 {strides = array<i32>} : memref<2x10xf32, #tpu.memory_space<vmem>>, vector<2x10xf32>,
    return
  }
  func.func @transform_0(%arg0: i32) -> (i32, i32) {
    %c0_i32 = arith.constant 0 : i32
    %c0_i32_0 = arith.constant 0 : i32
    return %arg0, %c0_i32 : i32, i32
  }
  func.func @transform_1(%arg0: i32) -> (i32, i32) {
    %c0_i32 = arith.constant 0 : i32
    %c0_i32_0 = arith.constant 0 : i32
    %c0_i32_1 = arith.constant 0 : i32
    return %c0_i32, %c0_i32_0 : i32, i32
  }
  func.func @transform_2(%arg0: i32) -> (i32, i32) {
    %c0_i32 = arith.constant 0 : i32
    %c0_i32_0 = arith.constant 0 : i32
    %c0_i32_1 = arith.constant 0 : i32
    return %c0_i32, %c0_i32_0 : i32, i32
  }
  func.func @transform_3(%arg0: i32) -> (i32, i32) {
    %c0_i32 = arith.constant 0 : i32
    %c0_i32_0 = arith.constant 0 : i32
    return %arg0, %c0_i32 : i32, i32
  }
}

</mosaic_0001>

<llo_original>
// kernel: tpu_custom_call.1
$region0: #{tpu_custom_call.1}
  #allocation0 [shape = 'u32[]', space=smem, size = 0x4, offset = 0x4, fixed_abs, tag = 'smem constant byte address 0x4 - core index']
  #allocation1 [shape = 'u32[144,128]{1,0:T(1,128)}', space=vmem, size = 0x12000, scoped, tag = 'internal scratch']
  %s0 = inlined_call_operand.vmem [shape: bf16[2,784], index: 0, kind: input, shape index: {}]
  %s1 = inlined_call_operand.vmem [shape: bf16[784,10], index: 1, kind: input, shape index: {}]
  %s2 = inlined_call_operand.vmem [shape: f32[1,10], index: 2, kind: input, shape index: {}]
  %s3 = inlined_call_operand.hbm [shape: f32[2,10], index: 3, kind: output, shape index: {}]
  %s4 = sld [smem:[#allocation0]]
  $region22: #{tpu_custom_call.1} parent=0
    _
  %s6 = ssub.s32 1, %s4
  %s7 = scalar_select 0, %s6, %s4
  $region1: #{tpu_custom_call.1} parent=0
    #allocation2 [shape = 'u8[1024]{0}', space=vmem, size = 0x400, scoped, tag = 'output window, operand 0, single buffered']
    #allocation3 [shape = 's32[1]{0}', space=sflag, size = 0x4, scoped, tag = 'scoped memory for tpu_custom_call.1']
    %8 = vsyncpa [#allocation3], 0
    // Predicated region
    $region2: #{tpu_custom_call.1} parent=1 // pred_check
      _
    $region3: #{tpu_custom_call.1} parent=1 // pred_check_branch
      %10 = sbr.rel (0) target = $region5
    $region4: #{tpu_custom_call.1} parent=1 // pred_region
      _
    $region5: #{tpu_custom_call.1} parent=1 // pred_fallthru
      _
    // Predicated region
    $region6: #{tpu_custom_call.1} parent=1 // pred_check
      _
    $region7: #{tpu_custom_call.1} parent=1 // pred_check_branch
      %12 = sbr.rel (0) target = $region9
    $region8: #{tpu_custom_call.1} parent=1 // pred_region
      _
    $region9: #{tpu_custom_call.1} parent=1 // pred_fallthru
      _
    // Predicated region
    $region10: #{tpu_custom_call.1} parent=1 // pred_check
      _
    $region11: #{tpu_custom_call.1} parent=1 // pred_check_branch
      %14 = sbr.rel (0) target = $region13
    $region12: #{tpu_custom_call.1} parent=1 // pred_region
      _
    $region13: #{tpu_custom_call.1} parent=1 // pred_fallthru
      _
    %v16 = vld [vmem:[%s0] sm:$0x7f]
    %v17 = vld [vmem:[%s1] sm:$0xf]
    %v18 = vld [vmem:[%s1 + $0x4] sm:$0xf]
    %v19 = vld [vmem:[%s1 + $0x8] sm:$0xf]
    %v20 = vld [vmem:[%s1 + $0xc] sm:$0xf]
    %v21 = vld [vmem:[%s1 + $0x10] sm:$0xf]
    %v22 = vld [vmem:[%s1 + $0x14] sm:$0xf]
    %v23 = vld [vmem:[%s1 + $0x18] sm:$0xf]
    %v24 = vld [vmem:[%s1 + $0x1c] sm:$0xf]
    %v25 = vld [vmem:[%s1 + $0x20] sm:$0xf]
    %v26 = vld [vmem:[%s1 + $0x24] sm:$0xf]
    %v27 = vld [vmem:[%s1 + $0x28] sm:$0xf]
    %v28 = vld [vmem:[%s1 + $0x2c] sm:$0xf]
    %v29 = vld [vmem:[%s1 + $0x30] sm:$0xf]
    %v30 = vld [vmem:[%s1 + $0x34] sm:$0xf]
    %v31 = vld [vmem:[%s1 + $0x38] sm:$0xf]
    %v32 = vld [vmem:[%s1 + $0x3c] sm:$0xf]
    %v33 = vld [vmem:[%s1 + $0x40] sm:$0xf]
    %v34 = vld [vmem:[%s1 + $0x44] sm:$0xf]
    %v35 = vld [vmem:[%s1 + $0x48] sm:$0xf]
    %v36 = vld [vmem:[%s1 + $0x4c] sm:$0xf]
    %v37 = vld [vmem:[%s1 + $0x50] sm:$0xf]
    %v38 = vld [vmem:[%s1 + $0x54] sm:$0xf]
    %v39 = vld [vmem:[%s1 + $0x58] sm:$0xf]
    %v40 = vld [vmem:[%s1 + $0x5c] sm:$0xf]
    %v41 = vld [vmem:[%s1 + $0x60] sm:$0xf]
    %v42 = vld [vmem:[%s1 + $0x64] sm:$0xf]
    %v43 = vld [vmem:[%s1 + $0x68] sm:$0xf]
    %v44 = vld [vmem:[%s1 + $0x6c] sm:$0xf]
    %v45 = vld [vmem:[%s1 + $0x70] sm:$0xf]
    %v46 = vld [vmem:[%s1 + $0x74] sm:$0xf]
    %v47 = vld [vmem:[%s1 + $0x78] sm:$0xf]
    %v48 = vld [vmem:[%s1 + $0x7c] sm:$0xf]
    %v49 = vld [vmem:[%s1 + $0x80] sm:$0xf]
    %v50 = vld [vmem:[%s1 + $0x84] sm:$0xf]
    %v51 = vld [vmem:[%s1 + $0x88] sm:$0xf]
    %v52 = vld [vmem:[%s1 + $0x8c] sm:$0xf]
    %v53 = vld [vmem:[%s1 + $0x90] sm:$0xf]
    %v54 = vld [vmem:[%s1 + $0x94] sm:$0xf]
    %v55 = vld [vmem:[%s1 + $0x98] sm:$0xf]
    %v56 = vld [vmem:[%s1 + $0x9c] sm:$0xf]
    %v57 = vld [vmem:[%s1 + $0xa0] sm:$0xf]
    %v58 = vld [vmem:[%s1 + $0xa4] sm:$0xf]
    %v59 = vld [vmem:[%s1 + $0xa8] sm:$0xf]
    %v60 = vld [vmem:[%s1 + $0xac] sm:$0xf]
    %v61 = vld [vmem:[%s1 + $0xb0] sm:$0xf]
    %v62 = vld [vmem:[%s1 + $0xb4] sm:$0xf]
    %v63 = vld [vmem:[%s1 + $0xb8] sm:$0xf]
    %v64 = vld [vmem:[%s1 + $0xbc] sm:$0xf]
    %v65 = vld [vmem:[%s1 + $0xc0] sm:$0xf]
    %v66 = vld [vmem:[%s1 + $0xc4] sm:$0xf]
    %v67 = vld [vmem:[%s1 + $0xc8] sm:$0xf]
    %v68 = vld [vmem:[%s1 + $0xcc] sm:$0xf]
    %v69 = vld [vmem:[%s1 + $0xd0] sm:$0xf]
    %v70 = vld [vmem:[%s1 + $0xd4] sm:$0xf]
    %v71 = vld [vmem:[%s1 + $0xd8] sm:$0xf]
    %v72 = vld [vmem:[%s1 + $0xdc] sm:$0xf]
    %v73 = vld [vmem:[%s1 + $0xe0] sm:$0xf]
    %v74 = vld [vmem:[%s1 + $0xe4] sm:$0xf]
    %v75 = vld [vmem:[%s1 + $0xe8] sm:$0xf]
    %v76 = vld [vmem:[%s1 + $0xec] sm:$0xf]
    %v77 = vld [vmem:[%s1 + $0xf0] sm:$0xf]
    %v78 = vld [vmem:[%s1 + $0xf4] sm:$0xf]
    %v79 = vld [vmem:[%s1 + $0xf8] sm:$0xf]
    %v80 = vld [vmem:[%s1 + $0xfc] sm:$0xf]
    %v81 = vld [vmem:[%s1 + $0x100] sm:$0xf]
    %v82 = vld [vmem:[%s1 + $0x104] sm:$0xf]
    %v83 = vld [vmem:[%s1 + $0x108] sm:$0xf]
    %v84 = vld [vmem:[%s1 + $0x10c] sm:$0xf]
    %v85 = vld [vmem:[%s1 + $0x110] sm:$0xf]
    %v86 = vld [vmem:[%s1 + $0x114] sm:$0xf]
    %v87 = vld [vmem:[%s1 + $0x118] sm:$0xf]
    %v88 = vld [vmem:[%s1 + $0x11c] sm:$0xf]
    %v89 = vld [vmem:[%s1 + $0x120] sm:$0xf]
    %v90 = vld [vmem:[%s1 + $0x124] sm:$0xf]
    %v91 = vld [vmem:[%s1 + $0x128] sm:$0xf]
    %v92 = vld [vmem:[%s1 + $0x12c] sm:$0xf]
    %v93 = vld [vmem:[%s1 + $0x130] sm:$0xf]
    %v94 = vld [vmem:[%s1 + $0x134] sm:$0xf]
    %v95 = vld [vmem:[%s1 + $0x138] sm:$0xf]
    %v96 = vld [vmem:[%s1 + $0x13c] sm:$0xf]
    %v97 = vld [vmem:[%s1 + $0x140] sm:$0xf]
    %v98 = vld [vmem:[%s1 + $0x144] sm:$0xf]
    %v99 = vld [vmem:[%s1 + $0x148] sm:$0xf]
    %v100 = vld [vmem:[%s1 + $0x14c] sm:$0xf]
    %v101 = vld [vmem:[%s1 + $0x150] sm:$0xf]
    %v102 = vld [vmem:[%s1 + $0x154] sm:$0xf]
    %v103 = vld [vmem:[%s1 + $0x158] sm:$0xf]
    %v104 = vld [vmem:[%s1 + $0x15c] sm:$0xf]
    %v105 = vld [vmem:[%s1 + $0x160] sm:$0xf]
    %v106 = vld [vmem:[%s1 + $0x164] sm:$0xf]
    %v107 = vld [vmem:[%s1 + $0x168] sm:$0xf]
    %v108 = vld [vmem:[%s1 + $0x16c] sm:$0xf]
    %v109 = vld [vmem:[%s1 + $0x170] sm:$0xf]
    %v110 = vld [vmem:[%s1 + $0x174] sm:$0xf]
    %v111 = vld [vmem:[%s1 + $0x178] sm:$0xf]
    %v112 = vld [vmem:[%s1 + $0x17c] sm:$0xf]
    %v113 = vld [vmem:[%s1 + $0x180] sm:$0xf]
    %v114 = vld [vmem:[%s1 + $0x184] sm:$0xf]
    %v115 = vld [vmem:[%s2] sm:$0x1]
    %v117 = vlaneseq
    %v118 = vshrl.u32 %v117, 7
    %v119 = vsub.s32 0, %v118
    %v120 = vrot.slane %v115, %v119
    %v123 = vcombine.high %v16, %v16
    %v125 = vunpack.c.l.s4 1966171168
    %v126 = vunpack.c.0.s8 %v125
    %v127 = vlaneseq
    %v128 = vshrl.u32 %v127, 7
    %v129 = vsub.s32 %v126, %v128
    %v130 = vrot.slane %v16, %v129
    %v132 = vunpack.c.l.s4 1966171168
    %v133 = vunpack.c.0.s8 %v132
    %v134 = vlaneseq
    %v135 = vshrl.u32 %v134, 7
    %v136 = vsub.s32 %v133, %v135
    %v137 = vrot.slane %v123, %v136
    %v138 = vcombine.high %v130, %v130
    %v139 = vcombine.high %v137, %v137
    %v141 = vunpack.c.l.s4 1966171168
    %v142 = vunpack.c.0.s8 %v141
    %v143 = vlaneseq
    %v144 = vshrl.u32 %v143, 7
    %v145 = vsub.s32 %v142, %v144
    %v146 = vrot.slane %v130, %v145
    %v148 = vunpack.c.l.s4 1966171168
    %v149 = vunpack.c.0.s8 %v148
    %v150 = vlaneseq
    %v151 = vshrl.u32 %v150, 7
    %v152 = vsub.s32 %v149, %v151
    %v153 = vrot.slane %v137, %v152
    %v155 = vunpack.c.l.s4 1966171168
    %v156 = vunpack.c.0.s8 %v155
    %v157 = vlaneseq
    %v158 = vshrl.u32 %v157, 7
    %v159 = vsub.s32 %v156, %v158
    %v160 = vrot.slane %v138, %v159
    %v162 = vunpack.c.l.s4 1966171168
    %v163 = vunpack.c.0.s8 %v162
    %v164 = vlaneseq
    %v165 = vshrl.u32 %v164, 7
    %v166 = vsub.s32 %v163, %v165
    %v167 = vrot.slane %v139, %v166
    %v168 = vcombine.high %v146, %v146
    %v169 = vcombine.high %v153, %v153
    %v170 = vcombine.high %v160, %v160
    %v275 = vunpack.c.l.b16 %v17
    %v276 = vunpack.c.l.b16 %v18
    %v277 = vunpack.c.l.b16 %v19
    %v278 = vunpack.c.l.b16 %v20
    %v279 = vunpack.c.l.b16 %v21
    %v280 = vunpack.c.l.b16 %v22
    %v281 = vunpack.c.l.b16 %v23
    %v282 = vunpack.c.l.b16 %v24
    %v283 = vunpack.c.l.b16 %v25
    %v284 = vunpack.c.l.b16 %v26
    %v285 = vunpack.c.l.b16 %v27
    %v286 = vunpack.c.l.b16 %v28
    %v287 = vunpack.c.l.b16 %v29
    %v288 = vunpack.c.l.b16 %v30
    %v289 = vunpack.c.l.b16 %v31
    %v290 = vunpack.c.l.b16 %v32
    %v291 = vunpack.c.l.b16 %v33
    %v292 = vunpack.c.l.b16 %v34
    %v293 = vunpack.c.l.b16 %v35
    %v294 = vunpack.c.l.b16 %v36
    %v295 = vunpack.c.l.b16 %v37
    %v296 = vunpack.c.l.b16 %v38
    %v297 = vunpack.c.l.b16 %v39
    %v298 = vunpack.c.l.b16 %v40
    %v299 = vunpack.c.l.b16 %v41
    %v300 = vunpack.c.l.b16 %v42
    %v301 = vunpack.c.l.b16 %v43
    %v302 = vunpack.c.l.b16 %v44
    %v303 = vunpack.c.l.b16 %v45
    %v304 = vunpack.c.l.b16 %v46
    %v305 = vunpack.c.l.b16 %v47
    %v306 = vunpack.c.l.b16 %v48
    %v307 = vunpack.c.l.b16 %v49
    %v308 = vunpack.c.l.b16 %v50
    %v309 = vunpack.c.l.b16 %v51
    %v310 = vunpack.c.l.b16 %v52
    %v311 = vunpack.c.l.b16 %v53
    %v312 = vunpack.c.l.b16 %v54
    %v313 = vunpack.c.l.b16 %v55
    %v314 = vunpack.c.l.b16 %v56
    %v315 = vunpack.c.l.b16 %v57
    %v316 = vunpack.c.l.b16 %v58
    %v317 = vunpack.c.l.b16 %v59
    %v318 = vunpack.c.l.b16 %v60
    %v319 = vunpack.c.l.b16 %v61
    %v320 = vunpack.c.l.b16 %v62
    %v321 = vunpack.c.l.b16 %v63
    %v322 = vunpack.c.l.b16 %v64
    %v323 = vunpack.c.l.b16 %v65
    %v324 = vunpack.c.l.b16 %v66
    %v325 = vunpack.c.l.b16 %v67
    %v326 = vunpack.c.l.b16 %v68
    %v327 = vunpack.c.l.b16 %v69
    %v328 = vunpack.c.l.b16 %v70
    %v329 = vunpack.c.l.b16 %v71
    %v330 = vunpack.c.l.b16 %v72
    %v331 = vunpack.c.l.b16 %v73
    %v332 = vunpack.c.l.b16 %v74
    %v333 = vunpack.c.l.b16 %v75
    %v334 = vunpack.c.l.b16 %v76
    %v335 = vunpack.c.l.b16 %v77
    %v336 = vunpack.c.l.b16 %v78
    %v337 = vunpack.c.l.b16 %v79
    %v338 = vunpack.c.l.b16 %v80
    %v339 = vunpack.c.l.b16 %v81
    %v340 = vunpack.c.l.b16 %v82
    %v341 = vunpack.c.l.b16 %v83
    %v342 = vunpack.c.l.b16 %v84
    %v343 = vunpack.c.l.b16 %v85
    %v344 = vunpack.c.l.b16 %v86
    %v345 = vunpack.c.l.b16 %v87
    %v346 = vunpack.c.l.b16 %v88
    %v347 = vunpack.c.l.b16 %v89
    %v348 = vunpack.c.l.b16 %v90
    %v349 = vunpack.c.l.b16 %v91
    %v350 = vunpack.c.l.b16 %v92
    %v351 = vunpack.c.l.b16 %v93
    %v352 = vunpack.c.l.b16 %v94
    %v353 = vunpack.c.l.b16 %v95
    %v354 = vunpack.c.l.b16 %v96
    %v355 = vunpack.c.l.b16 %v97
    %v356 = vunpack.c.l.b16 %v98
    %v357 = vunpack.c.l.b16 %v99
    %v358 = vunpack.c.l.b16 %v100
    %v359 = vunpack.c.l.b16 %v101
    %v360 = vunpack.c.l.b16 %v102
    %v361 = vunpack.c.l.b16 %v103
    %v362 = vunpack.c.l.b16 %v104
    %v363 = vunpack.c.l.b16 %v105
    %v364 = vunpack.c.l.b16 %v106
    %v365 = vunpack.c.l.b16 %v107
    %v366 = vunpack.c.l.b16 %v108
    %v367 = vunpack.c.l.b16 %v109
    %v368 = vunpack.c.l.b16 %v110
    %v369 = vunpack.c.l.b16 %v111
    %v370 = vunpack.c.l.b16 %v112
    %v371 = vunpack.c.l.b16 %v113
    %v372 = vunpack.c.l.b16 %v114
    %v373 = vpack.c.b16 %v276, %v275
    %v374 = vpack.c.b16 %v278, %v277
    %v375 = vpack.c.b16 %v280, %v279
    %v376 = vpack.c.b16 %v282, %v281
    %v377 = vpack.c.b16 %v284, %v283
    %v378 = vpack.c.b16 %v286, %v285
    %v379 = vpack.c.b16 %v288, %v287
    %v380 = vpack.c.b16 %v290, %v289
    %v381 = vpack.c.b16 %v292, %v291
    %v382 = vpack.c.b16 %v294, %v293
    %v383 = vpack.c.b16 %v296, %v295
    %v384 = vpack.c.b16 %v298, %v297
    %v385 = vpack.c.b16 %v300, %v299
    %v386 = vpack.c.b16 %v302, %v301
    %v387 = vpack.c.b16 %v304, %v303
    %v388 = vpack.c.b16 %v306, %v305
    %v389 = vpack.c.b16 %v308, %v307
    %v390 = vpack.c.b16 %v310, %v309
    %v391 = vpack.c.b16 %v312, %v311
    %v392 = vpack.c.b16 %v314, %v313
    %v393 = vpack.c.b16 %v316, %v315
    %v394 = vpack.c.b16 %v318, %v317
    %v395 = vpack.c.b16 %v320, %v319
    %v396 = vpack.c.b16 %v322, %v321
    %v397 = vpack.c.b16 %v324, %v323
    %v398 = vpack.c.b16 %v326, %v325
    %v399 = vpack.c.b16 %v328, %v327
    %v400 = vpack.c.b16 %v330, %v329
    %v401 = vpack.c.b16 %v332, %v331
    %v402 = vpack.c.b16 %v334, %v333
    %v403 = vpack.c.b16 %v336, %v335
    %v404 = vpack.c.b16 %v338, %v337
    %v405 = vpack.c.b16 %v340, %v339
    %v406 = vpack.c.b16 %v342, %v341
    %v407 = vpack.c.b16 %v344, %v343
    %v408 = vpack.c.b16 %v346, %v345
    %v409 = vpack.c.b16 %v348, %v347
    %v410 = vpack.c.b16 %v350, %v349
    %v411 = vpack.c.b16 %v352, %v351
    %v412 = vpack.c.b16 %v354, %v353
    %v413 = vpack.c.b16 %v356, %v355
    %v414 = vpack.c.b16 %v358, %v357
    %v415 = vpack.c.b16 %v360, %v359
    %v416 = vpack.c.b16 %v362, %v361
    %v417 = vpack.c.b16 %v364, %v363
    %v418 = vpack.c.b16 %v366, %v365
    %v419 = vpack.c.b16 %v368, %v367
    %v420 = vpack.c.b16 %v370, %v369
    %v421 = vpack.c.b16 %v372, %v371
    %vm471 = vcmask 130048
    %v473 = vsel %vm471, %v169, 0
    %475 = vmatprep.subr.bf16.mxu0 0
    %476 = vmatpush1.bf16.msra.mxu0 %v373
    %477 = vmatprep.subr.bf16.mxu0 0
    %478 = vmatpush1.bf16.msra.mxu0 %v374
    %479 = vmatprep.subr.bf16.mxu0 0
    %480 = vmatpush1.bf16.msra.mxu0 %v375
    %481 = vmatprep.subr.bf16.mxu0 0
    %482 = vmatpush1.bf16.msra.mxu0 %v376
    %483 = vmatprep.subr.bf16.mxu0 0
    %484 = vmatpush1.bf16.msra.mxu0 %v377
    %485 = vmatprep.subr.bf16.mxu0 0
    %486 = vmatpush1.bf16.msra.mxu0 %v378
    %487 = vmatprep.subr.bf16.mxu0 0
    %488 = vmatpush1.bf16.msra.mxu0 %v379
    %489 = vmatprep.subr.bf16.mxu0 0
    %490 = vmatpush1.bf16.msra.mxu0 %v380
    %491 = vmatprep.subr.bf16.mxu0 0
    %492 = vmatpush1.bf16.msra.mxu0 %v381
    %493 = vmatprep.subr.bf16.mxu0 0
    %494 = vmatpush1.bf16.msra.mxu0 %v382
    %495 = vmatprep.subr.bf16.mxu0 0
    %496 = vmatpush1.bf16.msra.mxu0 %v383
    %497 = vmatprep.subr.bf16.mxu0 0
    %498 = vmatpush1.bf16.msra.mxu0 %v384
    %499 = vmatprep.subr.bf16.mxu0 0
    %500 = vmatpush1.bf16.msra.mxu0 %v385
    %501 = vmatprep.subr.bf16.mxu0 0
    %502 = vmatpush1.bf16.msra.mxu0 %v386
    %503 = vmatprep.subr.bf16.mxu0 0
    %504 = vmatpush1.bf16.msra.mxu0 %v387
    %505 = vmatprep.subr.bf16.mxu0 0
    %506 = vmatpush1.bf16.msra.mxu0 %v388
    %507 = vmatprep.mubr.bf16.mxu0 %v160
    %508 = vmatmul.mubr.bf16.gmra.mrb[0].mxu0 %v146
    %v509 = vpop.f32.mrb[0].mxu0
    %v510 = vadd.f32 %v120, %v509
    %v511 = vpop.f32.mrb[0].mxu0
    %v512 = vpop.f32.mrb[0].mxu0
    %v513 = vpop.f32.mrb[0].mxu0
    %514 = vdwg.mxu0
    %515 = vmatprep.subr.bf16.mxu0 0
    %516 = vmatpush1.bf16.msra.mxu0 %v389
    %517 = vmatprep.subr.bf16.mxu0 0
    %518 = vmatpush1.bf16.msra.mxu0 %v390
    %519 = vmatprep.subr.bf16.mxu0 0
    %520 = vmatpush1.bf16.msra.mxu0 %v391
    %521 = vmatprep.subr.bf16.mxu0 0
    %522 = vmatpush1.bf16.msra.mxu0 %v392
    %523 = vmatprep.subr.bf16.mxu0 0
    %524 = vmatpush1.bf16.msra.mxu0 %v393
    %525 = vmatprep.subr.bf16.mxu0 0
    %526 = vmatpush1.bf16.msra.mxu0 %v394
    %527 = vmatprep.subr.bf16.mxu0 0
    %528 = vmatpush1.bf16.msra.mxu0 %v395
    %529 = vmatprep.subr.bf16.mxu0 0
    %530 = vmatpush1.bf16.msra.mxu0 %v396
    %531 = vmatprep.subr.bf16.mxu0 0
    %532 = vmatpush1.bf16.msra.mxu0 %v397
    %533 = vmatprep.subr.bf16.mxu0 0
    %534 = vmatpush1.bf16.msra.mxu0 %v398
    %535 = vmatprep.subr.bf16.mxu0 0
    %536 = vmatpush1.bf16.msra.mxu0 %v399
    %537 = vmatprep.subr.bf16.mxu0 0
    %538 = vmatpush1.bf16.msra.mxu0 %v400
    %539 = vmatprep.subr.bf16.mxu0 0
    %540 = vmatpush1.bf16.msra.mxu0 %v401
    %541 = vmatprep.subr.bf16.mxu0 0
    %542 = vmatpush1.bf16.msra.mxu0 %v402
    %543 = vmatprep.subr.bf16.mxu0 0
    %544 = vmatpush1.bf16.msra.mxu0 %v403
    %545 = vmatprep.subr.bf16.mxu0 0
    %546 = vmatpush1.bf16.msra.mxu0 %v404
    %547 = vmatprep.mubr.bf16.mxu0 %v170
    %548 = vmatmul.mubr.bf16.gmra.mrb[0].mxu0 %v168
    %v549 = vpop.f32.mrb[0].mxu0
    %v550 = vadd.f32 %v510, %v549
    %v551 = vpop.f32.mrb[0].mxu0
    %v552 = vpop.f32.mrb[0].mxu0
    %v553 = vpop.f32.mrb[0].mxu0
    %554 = vdwg.mxu0
    %555 = vmatprep.subr.bf16.mxu0 0
    %556 = vmatpush1.bf16.msra.mxu0 %v405
    %557 = vmatprep.subr.bf16.mxu0 0
    %558 = vmatpush1.bf16.msra.mxu0 %v406
    %559 = vmatprep.subr.bf16.mxu0 0
    %560 = vmatpush1.bf16.msra.mxu0 %v407
    %561 = vmatprep.subr.bf16.mxu0 0
    %562 = vmatpush1.bf16.msra.mxu0 %v408
    %563 = vmatprep.subr.bf16.mxu0 0
    %564 = vmatpush1.bf16.msra.mxu0 %v409
    %565 = vmatprep.subr.bf16.mxu0 0
    %566 = vmatpush1.bf16.msra.mxu0 %v410
    %567 = vmatprep.subr.bf16.mxu0 0
    %568 = vmatpush1.bf16.msra.mxu0 %v411
    %569 = vmatprep.subr.bf16.mxu0 0
    %570 = vmatpush1.bf16.msra.mxu0 %v412
    %571 = vmatprep.subr.bf16.mxu0 0
    %572 = vmatpush1.bf16.msra.mxu0 %v413
    %573 = vmatprep.subr.bf16.mxu0 0
    %574 = vmatpush1.bf16.msra.mxu0 %v414
    %575 = vmatprep.subr.bf16.mxu0 0
    %576 = vmatpush1.bf16.msra.mxu0 %v415
    %577 = vmatprep.subr.bf16.mxu0 0
    %578 = vmatpush1.bf16.msra.mxu0 %v416
    %579 = vmatprep.subr.bf16.mxu0 0
    %580 = vmatpush1.bf16.msra.mxu0 %v417
    %581 = vmatprep.subr.bf16.mxu0 0
    %582 = vmatpush1.bf16.msra.mxu0 %v418
    %583 = vmatprep.subr.bf16.mxu0 0
    %584 = vmatpush1.bf16.msra.mxu0 %v419
    %585 = vmatprep.subr.bf16.mxu0 0
    %586 = vmatpush1.bf16.msra.mxu0 %v420
    %587 = vmatprep.mubr.bf16.mxu0 %v167
    %588 = vmatmul.mubr.bf16.gmra.mrb[0].mxu0 %v153
    %v589 = vpop.f32.mrb[0].mxu0
    %v590 = vadd.f32 %v550, %v589
    %v591 = vpop.f32.mrb[0].mxu0
    %v592 = vpop.f32.mrb[0].mxu0
    %v593 = vpop.f32.mrb[0].mxu0
    %594 = vdwg.mxu0
    %595 = vmatprep.subr.bf16.mxu0 0
    %596 = vmatpush1.bf16.msra.mxu0 %v421
    %597 = vmatprep.subr.bf16.mxu0 0
    %598 = vmatpush1.bf16.msra.mxu0 0
    %599 = vmatprep.subr.bf16.mxu0 0
    %600 = vmatpush1.bf16.msra.mxu0 0
    %601 = vmatprep.subr.bf16.mxu0 0
    %602 = vmatpush1.bf16.msra.mxu0 0
    %603 = vmatprep.subr.bf16.mxu0 0
    %604 = vmatpush1.bf16.msra.mxu0 0
    %605 = vmatprep.subr.bf16.mxu0 0
    %606 = vmatpush1.bf16.msra.mxu0 0
    %607 = vmatprep.subr.bf16.mxu0 0
    %608 = vmatpush1.bf16.msra.mxu0 0
    %609 = vmatprep.subr.bf16.mxu0 0
    %610 = vmatpush1.bf16.msra.mxu0 0
    %611 = vmatprep.subr.bf16.mxu0 0
    %612 = vmatpush1.bf16.msra.mxu0 0
    %613 = vmatprep.subr.bf16.mxu0 0
    %614 = vmatpush1.bf16.msra.mxu0 0
    %615 = vmatprep.subr.bf16.mxu0 0
    %616 = vmatpush1.bf16.msra.mxu0 0
    %617 = vmatprep.subr.bf16.mxu0 0
    %618 = vmatpush1.bf16.msra.mxu0 0
    %619 = vmatprep.subr.bf16.mxu0 0
    %620 = vmatpush1.bf16.msra.mxu0 0
    %621 = vmatprep.subr.bf16.mxu0 0
    %622 = vmatpush1.bf16.msra.mxu0 0
    %623 = vmatprep.subr.bf16.mxu0 0
    %624 = vmatpush1.bf16.msra.mxu0 0
    %625 = vmatprep.subr.bf16.mxu0 0
    %626 = vmatpush1.bf16.msra.mxu0 0
    %627 = vmatprep.mubr.bf16.mxu0 0
    %628 = vmatmul.mubr.bf16.gmra.mrb[0].mxu0 %v473
    %v629 = vpop.f32.mrb[0].mxu0
    %v630 = vadd.f32 %v590, %v629
    %v631 = vpop.f32.mrb[0].mxu0
    %v632 = vpop.f32.mrb[0].mxu0
    %v633 = vpop.f32.mrb[0].mxu0
    %634 = vdwg.mxu0
    %vm635 = vcmask 74752
    %636 = vst.msk [vmem:[#allocation2] sm:$0x3] %vm635, %v630
    // Predicated region
    $region14: #{tpu_custom_call.1} parent=1 // pred_check
      _
    $region15: #{tpu_custom_call.1} parent=1 // pred_check_branch
      %638 = sbr.rel (0) target = $region17
    $region16: #{tpu_custom_call.1} parent=1 // pred_region
      %s640 = ssub.s32 32, 32
      %641 = vsyncadd [#allocation3], %s640
      %s643 = sshll.u32 [#allocation2], 4
      %s644 = int_to_ptr.vmem [resolvable:$true] %s643
      %646 = dma.vmem_to_hbm [thread:$0]  %s644, 32, %s3, [#allocation3]
    $region17: #{tpu_custom_call.1} parent=1 // pred_fallthru
      _
    // Predicated region
    $region18: #{tpu_custom_call.1} parent=1 // pred_check
      _
    $region19: #{tpu_custom_call.1} parent=1 // pred_check_branch
      %648 = sbr.rel (0) target = $region21
    $region20: #{tpu_custom_call.1} parent=1 // pred_region
      %649 = dma.done [#allocation3], 32
    $region21: #{tpu_custom_call.1} parent=1 // pred_fallthru
      _
    %650 = vsyncpa [#allocation3], 1

</llo_original>
